<compile_context>
chip_gen: v6e
topology: v6e:2x2x1
jax: 0.10.0
libtpu: 0.0.40
codegen_flags: <defaults>
</compile_context>

<pallas_src>
import jax
import jax.numpy as jnp
from jax import lax
from jax.experimental import pallas as pl
from jax.experimental.pallas import tpu as pltpu


def rnn_fc_kernel(pre_ref, w_hh_ref, w_fc_top_ref, w_fc_bot_ref, b_fc_ref, out_ref):
    T, R, H = pre_ref.shape          # R = 2*BB: text rows [0:BB], context rows [BB:2BB]
    BB = R // 2

    # w_hh loaded once (bf16, 8 vregs at H=128) and reused across every unrolled step;
    # relying on Mosaic to keep the constant RHS resident across the unrolled dots.
    w_hh = w_hh_ref[...]

    # h0 == 0  =>  step 0 is just tanh(pre[0]); skip the zero matmul.
    h = jnp.tanh(pre_ref[0])
    for t in range(1, T):            # T is static -> fully unrolled serial recurrence
        h = jnp.tanh(pre_ref[t] +
                     jnp.dot(h.astype(w_hh.dtype), w_hh,
                             preferred_element_type=jnp.float32))

    # FC on concat([h_text, h_ctx], axis=1) without any sublane-offset concat:
    # both row halves are 8-aligned, so this is two dense MXU dots + add.
    h_bf = h.astype(w_fc_top_ref.dtype)
    logits = (jnp.dot(h_bf[:BB], w_fc_top_ref[...], preferred_element_type=jnp.float32)
              + jnp.dot(h_bf[BB:], w_fc_bot_ref[...], preferred_element_type=jnp.float32)
              + b_fc_ref[...])
    out_ref[...] = logits.astype(out_ref.dtype)


def _round_up(x, m):
    return ((x + m - 1) // m) * m


def rnn_model_forward(text, context, params, *, batch_block=256):
    """text, context: (B, T) int32 token ids."""
    emb_w = params["embedding"]                      # (V, E)
    B, T = text.shape
    H = params["w_hh"].shape[0]
    O = params["w_fc"].shape[1]

    H_pad = _round_up(H, 128)
    O_pad = _round_up(O, 128)
    B_pad = _round_up(B, 8)
    BB = min(B_pad, _round_up(batch_block, 8))       # rows per grid block (multiple of 8)
    G = pl.cdiv(B_pad, BB)
    B_tot = G * BB

    # ---- Parameter prep (pure function of the weights; cacheable across calls). ----
    # Fold input projection + both RNN biases into a (V, H) table: pre = proj[token].
    proj = emb_w @ params["w_ih"] + (params["b_ih"] + params["b_hh"])        # (V, H)
    proj = jnp.pad(proj, ((0, 0), (0, H_pad - H))).astype(jnp.float32)

    w_hh = jnp.pad(params["w_hh"],
                   ((0, H_pad - H), (0, H_pad - H))).astype(jnp.bfloat16)
    w_fc_top = jnp.pad(params["w_fc"][:H],
                       ((0, H_pad - H), (0, O_pad - O))).astype(jnp.bfloat16)
    w_fc_bot = jnp.pad(params["w_fc"][H:],
                       ((0, H_pad - H), (0, O_pad - O))).astype(jnp.bfloat16)
    b_fc = jnp.pad(params["b_fc"], ((0, 0), (0, O_pad - O))).astype(jnp.float32)

    # ---- Token layout glue: per batch block -> text rows then context rows, seq-major. ----
    def pad_rows(tok):
        return jnp.pad(tok, ((0, B_tot - B), (0, 0)))                       # (B_tot, T)

    tok = jnp.stack([pad_rows(text).reshape(G, BB, T),
                     pad_rows(context).reshape(G, BB, T)], axis=1)           # (G, 2, BB, T)
    tok = tok.reshape(G * 2 * BB, T).T                                       # (T, G*2*BB)
    pre = jnp.take(proj, tok, axis=0)                                        # (T, G*2*BB, H_pad) f32

    out = pl.pallas_call(
        rnn_fc_kernel,
        out_shape=jax.ShapeDtypeStruct((B_tot, O_pad), jnp.float32),
        grid=(G,),
        in_specs=[
            pl.BlockSpec((T, 2 * BB, H_pad), lambda i: (0, i, 0)),   # pre-activations
            pl.BlockSpec((H_pad, H_pad), lambda i: (0, 0)),          # w_hh (bf16)
            pl.BlockSpec((H_pad, O_pad), lambda i: (0, 0)),          # w_fc top half (bf16)
            pl.BlockSpec((H_pad, O_pad), lambda i: (0, 0)),          # w_fc bottom half (bf16)
            pl.BlockSpec((1, O_pad), lambda i: (0, 0)),              # b_fc
        ],
        out_specs=pl.BlockSpec((BB, O_pad), lambda i: (i, 0)),
        compiler_params=pltpu.CompilerParams(
            dimension_semantics=("parallel",)),                      # megacore split on v7x
    )(pre, w_hh, w_fc_top, w_fc_bot, b_fc)

    return out[:B, :O]


def reference_forward(text, context, params):
    """Pure-JAX f32 reference matching torch semantics (h_t = tanh(x W_ih^T + b_ih + h W_hh^T + b_hh))."""
    emb_w = params["embedding"]

    def run(tokens):
        x = jnp.take(emb_w, tokens, axis=0)        # (B, T, E)
        B = x.shape[0]
        H = params["w_hh"].shape[0]
        h0 = jnp.zeros((B, H), jnp.float32)

        def step(h, x_t):
            h_new = jnp.tanh(x_t @ params["w_ih"] + h @ params["w_hh"]
                             + params["b_ih"][0] + params["b_hh"][0])
            return h_new, None

        h_final, _ = lax.scan(step, h0, jnp.transpose(x, (1, 0, 2)))
        return h_final

    h_text = run(text)
    h_ctx = run(context)
    combined = jnp.concatenate([h_text, h_ctx], axis=1)
    return combined @ params["w_fc"] + params["b_fc"][0]


def init_params(key, vocab_size, embedding_dim=100, hidden_dim=128, output_dim=3):
    ks = jax.random.split(key, 7)
    s_rnn = 1.0 / jnp.sqrt(hidden_dim)
    s_fc = 1.0 / jnp.sqrt(2 * hidden_dim)
    return {
        "embedding": jax.random.normal(ks[0], (vocab_size, embedding_dim), jnp.float32),
        # stored transposed relative to torch: (E, H), (H, H), (2H, O)
        "w_ih": jax.random.uniform(ks[1], (embedding_dim, hidden_dim), jnp.float32, -s_rnn, s_rnn),
        "w_hh": jax.random.uniform(ks[2], (hidden_dim, hidden_dim), jnp.float32, -s_rnn, s_rnn),
        "b_ih": jax.random.uniform(ks[3], (1, hidden_dim), jnp.float32, -s_rnn, s_rnn),
        "b_hh": jax.random.uniform(ks[4], (1, hidden_dim), jnp.float32, -s_rnn, s_rnn),
        "w_fc": jax.random.uniform(ks[5], (2 * hidden_dim, output_dim), jnp.float32, -s_fc, s_fc),
        "b_fc": jax.random.uniform(ks[6], (1, output_dim), jnp.float32, -s_fc, s_fc),
    }


if __name__ == "__main__":
    key = jax.random.PRNGKey(0)
    vocab_size, embedding_dim, hidden_dim, output_dim = 50, 100, 128, 3
    B, T = 2, 8

    kp, kt, kc = jax.random.split(key, 3)
    params = init_params(kp, vocab_size, embedding_dim, hidden_dim, output_dim)
    text = jax.random.randint(kt, (B, T), 0, vocab_size, dtype=jnp.int32)
    context = jax.random.randint(kc, (B, T), 0, vocab_size, dtype=jnp.int32)

    out = rnn_model_forward(text, context, params)
    out = jax.block_until_ready(out)

    ref = reference_forward(text, context, params)
    assert out.shape == (B, output_dim)
    # bf16 MXU operands (f32 accumulate) through the 8-step recurrence -> loosened tolerance.
    assert jnp.allclose(out, ref, rtol=2e-2, atol=2e-2), (out, ref)

    print("KERNEL_OK")
</pallas_src>

<mosaic_0001>
module attributes {stable_mosaic.version = 11 : i64} {
  func.func @rnn_fc_kernel(%arg0: i32, %arg1: memref<8x16x128xf32, #tpu.memory_space<vmem>>, %arg2: memref<128x128xbf16, #tpu.memory_space<vmem>>, %arg3: memref<128x128xbf16, #tpu.memory_space<vmem>>, %arg4: memref<128x128xbf16, #tpu.memory_space<vmem>>, %arg5: memref<1x128xf32, #tpu.memory_space<vmem>>, %arg6: memref<8x128xf32, #tpu.memory_space<vmem>>) attributes {dimension_semantics = [#tpu.dimension_semantics<parallel>], iteration_bounds = array<i64: 1>, scalar_prefetch = 0 : i64, scratch_operands = 0 : i64, tpu.core_type = #tpu.core_type<tc>, window_params = [{transform_indices = @transform_0, window_bounds = array<i64: 8, 16, 128>}, {pipeline_mode = #tpu.pipeline_mode<synchronous>, transform_indices = @transform_1, window_bounds = array<i64: 128, 128>}, {pipeline_mode = #tpu.pipeline_mode<synchronous>, transform_indices = @transform_2, window_bounds = array<i64: 128, 128>}, {pipeline_mode = #tpu.pipeline_mode<synchronous>, transform_indices = @transform_3, window_bounds = array<i64: 128, 128>}, {pipeline_mode = #tpu.pipeline_mode<synchronous>, transform_indices = @transform_4, window_bounds = array<i64: 1, 128>}, {transform_indices = @transform_5, window_bounds = array<i64: 8, 128>}]} {
    %c0 = arith.constant 0 : index
    %c0_0 = arith.constant 0 : index
    %0 = vector.load %arg2[%c0, %c0_0] : memref<128x128xbf16, #tpu.memory_space<vmem>>, vector<128x128xbf16>
    %c0_1 = arith.constant 0 : index
    %c0_2 = arith.constant 0 : index
    %c0_3 = arith.constant 0 : index
    %1 = vector.load %arg1[%c0_1, %c0_2, %c0_3] : memref<8x16x128xf32, #tpu.memory_space<vmem>>, vector<1x16x128xf32>
    %2 = vector.shape_cast %1 : vector<1x16x128xf32> to vector<16x128xf32>
    %3 = math.tanh %2 : vector<16x128xf32>
    %c1 = arith.constant 1 : index
    %c0_4 = arith.constant 0 : index
    %c0_5 = arith.constant 0 : index
    %4 = vector.load %arg1[%c1, %c0_4, %c0_5] : memref<8x16x128xf32, #tpu.memory_space<vmem>>, vector<1x16x128xf32>
    %5 = vector.shape_cast %4 : vector<1x16x128xf32> to vector<16x128xf32>
    %6 = arith.truncf %3 : vector<16x128xf32> to vector<16x128xbf16>
    %cst = arith.constant dense<0.000000e+00> : vector<16x128xf32>
    %7 = tpu.matmul %6, %0, %cst {dimension_numbers = #tpu.dot_dimension_numbers<[1], [0], [0], [1], [0, 0, 1, 1], [], []>} : vector<16x128xbf16>, vector<128x128xbf16>, vector<16x128xf32> -> vector<16x128xf32>
    %8 = arith.addf %5, %7 : vector<16x128xf32>
    %9 = math.tanh %8 : vector<16x128xf32>
    %c2 = arith.constant 2 : index
    %c0_6 = arith.constant 0 : index
    %c0_7 = arith.constant 0 : index
    %10 = vector.load %arg1[%c2, %c0_6, %c0_7] : memref<8x16x128xf32, #tpu.memory_space<vmem>>, vector<1x16x128xf32>
    %11 = vector.shape_cast %10 : vector<1x16x128xf32> to vector<16x128xf32>
    %12 = arith.truncf %9 : vector<16x128xf32> to vector<16x128xbf16>
    %cst_8 = arith.constant dense<0.000000e+00> : vector<16x128xf32>
    %13 = tpu.matmul %12, %0, %cst_8 {dimension_numbers = #tpu.dot_dimension_numbers<[1], [0], [0], [1], [0, 0, 1, 1], [], []>} : vector<16x128xbf16>, vector<128x128xbf16>, vector<16x128xf32> -> vector<16x128xf32>
    %14 = arith.addf %11, %13 : vector<16x128xf32>
    %15 = math.tanh %14 : vector<16x128xf32>
    %c3 = arith.constant 3 : index
    %c0_9 = arith.constant 0 : index
    %c0_10 = arith.constant 0 : index
    %16 = vector.load %arg1[%c3, %c0_9, %c0_10] : memref<8x16x128xf32, #tpu.memory_space<vmem>>, vector<1x16x128xf32>
    %17 = vector.shape_cast %16 : vector<1x16x128xf32> to vector<16x128xf32>
    %18 = arith.truncf %15 : vector<16x128xf32> to vector<16x128xbf16>
    %cst_11 = arith.constant dense<0.000000e+00> : vector<16x128xf32>
    %19 = tpu.matmul %18, %0, %cst_11 {dimension_numbers = #tpu.dot_dimension_numbers<[1], [0], [0], [1], [0, 0, 1, 1], [], []>} : vector<16x128xbf16>, vector<128x128xbf16>, vector<16x128xf32> -> vector<16x128xf32>
    %20 = arith.addf %17, %19 : vector<16x128xf32>
    %21 = math.tanh %20 : vector<16x128xf32>
    %c4 = arith.constant 4 : index
    %c0_12 = arith.constant 0 : index
    %c0_13 = arith.constant 0 : index
    %22 = vector.load %arg1[%c4, %c0_12, %c0_13] : memref<8x16x128xf32, #tpu.memory_space<vmem>>, vector<1x16x128xf32>
    %23 = vector.shape_cast %22 : vector<1x16x128xf32> to vector<16x128xf32>
    %24 = arith.truncf %21 : vector<16x128xf32> to vector<16x128xbf16>
    %cst_14 = arith.constant dense<0.000000e+00> : vector<16x128xf32>
    %25 = tpu.matmul %24, %0, %cst_14 {dimension_numbers = #tpu.dot_dimension_numbers<[1], [0], [0], [1], [0, 0, 1, 1], [], []>} : vector<16x128xbf16>, vector<128x128xbf16>, vector<16x128xf32> -> vector<16x128xf32>
    %26 = arith.addf %23, %25 : vector<16x128xf32>
    %27 = math.tanh %26 : vector<16x128xf32>
    %c5 = arith.constant 5 : index
    %c0_15 = arith.constant 0 : index
    %c0_16 = arith.constant 0 : index
    %28 = vector.load %arg1[%c5, %c0_15, %c0_16] : memref<8x16x128xf32, #tpu.memory_space<vmem>>, vector<1x16x128xf32>
    %29 = vector.shape_cast %28 : vector<1x16x128xf32> to vector<16x128xf32>
    %30 = arith.truncf %27 : vector<16x128xf32> to vector<16x128xbf16>
    %cst_17 = arith.constant dense<0.000000e+00> : vector<16x128xf32>
    %31 = tpu.matmul %30, %0, %cst_17 {dimension_numbers = #tpu.dot_dimension_numbers<[1], [0], [0], [1], [0, 0, 1, 1], [], []>} : vector<16x128xbf16>, vector<128x128xbf16>, vector<16x128xf32> -> vector<16x128xf32>
    %32 = arith.addf %29, %31 : vector<16x128xf32>
    %33 = math.tanh %32 : vector<16x128xf32>
    %c6 = arith.constant 6 : index
    %c0_18 = arith.constant 0 : index
    %c0_19 = arith.constant 0 : index
    %34 = vector.load %arg1[%c6, %c0_18, %c0_19] : memref<8x16x128xf32, #tpu.memory_space<vmem>>, vector<1x16x128xf32>
    %35 = vector.shape_cast %34 : vector<1x16x128xf32> to vector<16x128xf32>
    %36 = arith.truncf %33 : vector<16x128xf32> to vector<16x128xbf16>
    %cst_20 = arith.constant dense<0.000000e+00> : vector<16x128xf32>
    %37 = tpu.matmul %36, %0, %cst_20 {dimension_numbers = #tpu.dot_dimension_numbers<[1], [0], [0], [1], [0, 0, 1, 1], [], []>} : vector<16x128xbf16>, vector<128x128xbf16>, vector<16x128xf32> -> vector<16x128xf32>
    %38 = arith.addf %35, %37 : vector<16x128xf32>
    %39 = math.tanh %38 : vector<16x128xf32>
    %c7 = arith.constant 7 : index
    %c0_21 = arith.constant 0 : index
    %c0_22 = arith.constant 0 : index
    %40 = vector.load %arg1[%c7, %c0_21, %c0_22] : memref<8x16x128xf32, #tpu.memory_space<vmem>>, vector<1x16x128xf32>
    %41 = vector.shape_cast %40 : vector<1x16x128xf32> to vector<16x128xf32>
    %42 = arith.truncf %39 : vector<16x128xf32> to vector<16x128xbf16>
    %cst_23 = arith.constant dense<0.000000e+00> : vector<16x128xf32>
    %43 = tpu.matmul %42, %0, %cst_23 {dimension_numbers = #tpu.dot_dimension_numbers<[1], [0], [0], [1], [0, 0, 1, 1], [], []>} : vector<16x128xbf16>, vector<128x128xbf16>, vector<16x128xf32> -> vector<16x128xf32>
    %44 = arith.addf %41, %43 : vector<16x128xf32>
    %45 = math.tanh %44 : vector<16x128xf32>
    %46 = arith.truncf %45 : vector<16x128xf32> to vector<16x128xbf16>
    %47 = vector.extract_strided_slice %46 {offsets = [0, 0], sizes = [8, 128], strides = [1, 1]} : vector<16x128xbf16> to vector<8x128xbf16>
    %c0_24 = arith.constant 0 : index
    %c0_25 = arith.constant 0 : index
    %48 = vector.load %arg3[%c0_24, %c0_25] : memref<128x128xbf16, #tpu.memory_space<vmem>>, vector<128x128xbf16>
    %cst_26 = arith.constant dense<0.000000e+00> : vector<8x128xf32>
    %49 = tpu.matmul %47, %48, %cst_26 {dimension_numbers = #tpu.dot_dimension_numbers<[1], [0], [0], [1], [0, 0, 1, 1], [], []>} : vector<8x128xbf16>, vector<128x128xbf16>, vector<8x128xf32> -> vector<8x128xf32>
    %50 = vector.extract_strided_slice %46 {offsets = [8, 0], sizes = [8, 128], strides = [1, 1]} : vector<16x128xbf16> to vector<8x128xbf16>
    %c0_27 = arith.constant 0 : index
    %c0_28 = arith.constant 0 : index
    %51 = vector.load %arg4[%c0_27, %c0_28] : memref<128x128xbf16, #tpu.memory_space<vmem>>, vector<128x128xbf16>
    %cst_29 = arith.constant dense<0.000000e+00> : vector<8x128xf32>
    %52 = tpu.matmul %50, %51, %cst_29 {dimension_numbers = #tpu.dot_dimension_numbers<[1], [0], [0], [1], [0, 0, 1, 1], [], []>} : vector<8x128xbf16>, vector<128x128xbf16>, vector<8x128xf32> -> vector<8x128xf32>
    %53 = arith.addf %49, %52 : vector<8x128xf32>
    %c0_30 = arith.constant 0 : index
    %c0_31 = arith.constant 0 : index
    %54 = vector.load %arg5[%c0_30, %c0_31] : memref<1x128xf32, #tpu.memory_space<vmem>>, vector<1x128xf32>
    %55 = vector.broadcast %54 : vector<1x128xf32> to vector<8x128xf32>
    %56 = arith.addf %53, %55 : vector<8x128xf32>
    %c0_32 = arith.constant 0 : index
    %c0_33 = arith.constant 0 : index
    %57 = vector.load %arg6[%c0_32, %c0_33] : memref<8x128xf32, #tpu.memory_space<vmem>>, vector<8x128xf32>
    tpu.vector_store %arg6[%c0_32, %c0_33], %56 {strides = array<i32>} : memref<8x128xf32, #tpu.memory_space<vmem>>, vector<8x128xf32>,
    return
  }
  func.func @transform_0(%arg0: i32) -> (i32, i32, i32) {
    %c0_i32 = arith.constant 0 : i32
    %c0_i32_0 = arith.constant 0 : i32
    %c0_i32_1 = arith.constant 0 : i32
    return %c0_i32, %arg0, %c0_i32_0 : i32, i32, i32
  }
  func.func @transform_1(%arg0: i32) -> (i32, i32) {
    %c0_i32 = arith.constant 0 : i32
    %c0_i32_0 = arith.constant 0 : i32
    %c0_i32_1 = arith.constant 0 : i32
    return %c0_i32, %c0_i32_0 : i32, i32
  }
  func.func @transform_2(%arg0: i32) -> (i32, i32) {
    %c0_i32 = arith.constant 0 : i32
    %c0_i32_0 = arith.constant 0 : i32
    %c0_i32_1 = arith.constant 0 : i32
    return %c0_i32, %c0_i32_0 : i32, i32
  }
  func.func @transform_3(%arg0: i32) -> (i32, i32) {
    %c0_i32 = arith.constant 0 : i32
    %c0_i32_0 = arith.constant 0 : i32
    %c0_i32_1 = arith.constant 0 : i32
    return %c0_i32, %c0_i32_0 : i32, i32
  }
  func.func @transform_4(%arg0: i32) -> (i32, i32) {
    %c0_i32 = arith.constant 0 : i32
    %c0_i32_0 = arith.constant 0 : i32
    %c0_i32_1 = arith.constant 0 : i32
    return %c0_i32, %c0_i32_0 : i32, i32
  }
  func.func @transform_5(%arg0: i32) -> (i32, i32) {
    %c0_i32 = arith.constant 0 : i32
    %c0_i32_0 = arith.constant 0 : i32
    return %arg0, %c0_i32 : i32, i32
  }
}

</mosaic_0001>

<llo_original>
// kernel: tpu_custom_call.1
$region0: #{tpu_custom_call.1}
  #allocation0 [shape = 'u32[]', space=smem, size = 0x4, offset = 0x4, fixed_abs, tag = 'smem constant byte address 0x4 - core index']
  #allocation1 [shape = 'u32[144,128]{1,0:T(1,128)}', space=vmem, size = 0x12000, scoped, tag = 'internal scratch']
  %s0 = inlined_call_operand.hbm [shape: f32[8,16,128], index: 0, kind: input, shape index: {}]
  %s1 = inlined_call_operand.hbm [shape: bf16[128,128], index: 1, kind: input, shape index: {}]
  %s2 = inlined_call_operand.hbm [shape: bf16[128,128], index: 2, kind: input, shape index: {}]
  %s3 = inlined_call_operand.hbm [shape: bf16[128,128], index: 3, kind: input, shape index: {}]
  %s4 = inlined_call_operand.vmem [shape: f32[1,128], index: 4, kind: input, shape index: {}]
  %s5 = inlined_call_operand.hbm [shape: f32[8,128], index: 5, kind: output, shape index: {}]
  %s6 = sld [smem:[#allocation0]]
  $region46: #{tpu_custom_call.1} parent=0
    _
  %s8 = ssub.s32 1, %s6
  %s9 = scalar_select 0, %s8, %s6
  $region1: #{tpu_custom_call.1} parent=0
    #allocation2 [shape = 'u8[65536]{0}', space=vmem, size = 0x10000, scoped, tag = 'input window, operand 0, single buffered']
    #allocation3 [shape = 's32[1]{0}', space=sflag, size = 0x4, scoped, tag = 'scoped memory for tpu_custom_call.1']
    #allocation4 [shape = 's32[1]{0}', space=sflag, size = 0x4, scoped, tag = 'scoped memory for tpu_custom_call.1']
    #allocation5 [shape = 'u8[32768]{0}', space=vmem, size = 0x8000, scoped, tag = 'input window, operand 1, single buffered']
    #allocation6 [shape = 's32[1]{0}', space=sflag, size = 0x4, scoped, tag = 'scoped memory for tpu_custom_call.1']
    #allocation7 [shape = 'u8[32768]{0}', space=vmem, size = 0x8000, scoped, tag = 'input window, operand 2, single buffered']
    #allocation8 [shape = 'u8[32768]{0}', space=vmem, size = 0x8000, scoped, tag = 'input window, operand 3, single buffered']
    #allocation9 [shape = 's32[1]{0}', space=sflag, size = 0x4, scoped, tag = 'scoped memory for tpu_custom_call.1']
    #allocation10 [shape = 'u8[4096]{0}', space=vmem, size = 0x1000, scoped, tag = 'output window, operand 0, single buffered']
    %10 = vsyncpa [#allocation3], 0
    %11 = vsyncpa [#allocation6], 0
    %12 = vsyncpa [#allocation9], 0
    %13 = vsyncpa [#allocation4], 0
    // Predicated region
    $region2: #{tpu_custom_call.1} parent=1 // pred_check
      _
    $region3: #{tpu_custom_call.1} parent=1 // pred_check_branch
      %15 = sbr.rel (0) target = $region5
    $region4: #{tpu_custom_call.1} parent=1 // pred_region
      %s17 = ssub.s32 2048, 2048
      %18 = vsyncadd [#allocation3], %s17
      %s19 = sshll.u32 [#allocation2], 4
      %s20 = int_to_ptr.vmem [resolvable:$true] %s19
      %25 = dma.hbm_to_vmem [thread:$0]  %s0, 2048, %s20, [#allocation3], 128, 128, 8
    $region5: #{tpu_custom_call.1} parent=1 // pred_fallthru
      _
    // Predicated region
    $region6: #{tpu_custom_call.1} parent=1 // pred_check
      _
    $region7: #{tpu_custom_call.1} parent=1 // pred_check_branch
      %27 = sbr.rel (0) target = $region9
    $region8: #{tpu_custom_call.1} parent=1 // pred_region
      %s29 = ssub.s32 1024, 1024
      %30 = vsyncadd [#allocation6], %s29
      %s31 = sshll.u32 [#allocation5], 4
      %s32 = int_to_ptr.vmem [resolvable:$true] %s31
      %37 = dma.hbm_to_vmem [thread:$0]  %s1, 1024, %s32, [#allocation6], 64, 64, 4
    $region9: #{tpu_custom_call.1} parent=1 // pred_fallthru
      _
    // Predicated region
    $region10: #{tpu_custom_call.1} parent=1 // pred_check
      _
    $region11: #{tpu_custom_call.1} parent=1 // pred_check_branch
      %39 = sbr.rel (0) target = $region13
    $region12: #{tpu_custom_call.1} parent=1 // pred_region
      %s41 = ssub.s32 1024, 1024
      %42 = vsyncadd [#allocation6], %s41
      %s43 = sshll.u32 [#allocation7], 4
      %s44 = int_to_ptr.vmem [resolvable:$true] %s43
      %49 = dma.hbm_to_vmem [thread:$0]  %s2, 1024, %s44, [#allocation6], 64, 64, 4
    $region13: #{tpu_custom_call.1} parent=1 // pred_fallthru
      _
    // Predicated region
    $region14: #{tpu_custom_call.1} parent=1 // pred_check
      _
    $region15: #{tpu_custom_call.1} parent=1 // pred_check_branch
      %51 = sbr.rel (0) target = $region17
    $region16: #{tpu_custom_call.1} parent=1 // pred_region
      %s53 = ssub.s32 1024, 1024
      %54 = vsyncadd [#allocation9], %s53
      %s55 = sshll.u32 [#allocation8], 4
      %s56 = int_to_ptr.vmem [resolvable:$true] %s55
      %61 = dma.hbm_to_vmem [thread:$0]  %s3, 1024, %s56, [#allocation9], 64, 64, 4
    $region17: #{tpu_custom_call.1} parent=1 // pred_fallthru
      _
    // Predicated region
    $region18: #{tpu_custom_call.1} parent=1 // pred_check
      _
    $region19: #{tpu_custom_call.1} parent=1 // pred_check_branch
      %63 = sbr.rel (0) target = $region21
    $region20: #{tpu_custom_call.1} parent=1 // pred_region
      _
    $region21: #{tpu_custom_call.1} parent=1 // pred_fallthru
      _
    // Predicated region
    $region22: #{tpu_custom_call.1} parent=1 // pred_check
      _
    $region23: #{tpu_custom_call.1} parent=1 // pred_check_branch
      %65 = sbr.rel (0) target = $region25
    $region24: #{tpu_custom_call.1} parent=1 // pred_region
      %66 = dma.done [#allocation3], 2048
    $region25: #{tpu_custom_call.1} parent=1 // pred_fallthru
      _
    // Predicated region
    $region26: #{tpu_custom_call.1} parent=1 // pred_check
      _
    $region27: #{tpu_custom_call.1} parent=1 // pred_check_branch
      %68 = sbr.rel (0) target = $region29
    $region28: #{tpu_custom_call.1} parent=1 // pred_region
      %69 = dma.done [#allocation6], 1024
    $region29: #{tpu_custom_call.1} parent=1 // pred_fallthru
      _
    // Predicated region
    $region30: #{tpu_custom_call.1} parent=1 // pred_check
      _
    $region31: #{tpu_custom_call.1} parent=1 // pred_check_branch
      %71 = sbr.rel (0) target = $region33
    $region32: #{tpu_custom_call.1} parent=1 // pred_region
      %72 = dma.done [#allocation6], 1024
    $region33: #{tpu_custom_call.1} parent=1 // pred_fallthru
      _
    // Predicated region
    $region34: #{tpu_custom_call.1} parent=1 // pred_check
      _
    $region35: #{tpu_custom_call.1} parent=1 // pred_check_branch
      %74 = sbr.rel (0) target = $region37
    $region36: #{tpu_custom_call.1} parent=1 // pred_region
      %75 = dma.done [#allocation9], 1024
    $region37: #{tpu_custom_call.1} parent=1 // pred_fallthru
      _
    %v77 = vld [vmem:[#allocation5] sm:$0xf]
    %v78 = vld [vmem:[#allocation5 + $0x4] sm:$0xf]
    %v79 = vld [vmem:[#allocation5 + $0x8] sm:$0xf]
    %v80 = vld [vmem:[#allocation5 + $0xc] sm:$0xf]
    %v81 = vld [vmem:[#allocation5 + $0x10] sm:$0xf]
    %v82 = vld [vmem:[#allocation5 + $0x14] sm:$0xf]
    %v83 = vld [vmem:[#allocation5 + $0x18] sm:$0xf]
    %v84 = vld [vmem:[#allocation5 + $0x1c] sm:$0xf]
    %v85 = vld [vmem:[#allocation5 + $0x20] sm:$0xf]
    %v86 = vld [vmem:[#allocation5 + $0x24] sm:$0xf]
    %v87 = vld [vmem:[#allocation5 + $0x28] sm:$0xf]
    %v88 = vld [vmem:[#allocation5 + $0x2c] sm:$0xf]
    %v89 = vld [vmem:[#allocation5 + $0x30] sm:$0xf]
    %v90 = vld [vmem:[#allocation5 + $0x34] sm:$0xf]
    %v91 = vld [vmem:[#allocation5 + $0x38] sm:$0xf]
    %v92 = vld [vmem:[#allocation5 + $0x3c] sm:$0xf]
    %v93 = vld [vmem:[#allocation2] sm:$0xff]
    %v94 = vld [vmem:[#allocation2 + $0x8] sm:$0xff]
    %v95 = vtanh.pop %v93
    %v96 = vtanh.pop %v94
    %s97 = scalar_lea.vmem [#allocation2], 16
    %v98 = vld [vmem:[%s97] sm:$0xff]
    %v99 = vld [vmem:[%s97 + $0x8] sm:$0xff]
    %v100 = vpack.c.bf16 %v96, %v95
    %v117 = vunpack.c.l.b16 %v77
    %v118 = vunpack.c.l.b16 %v78
    %v119 = vunpack.c.l.b16 %v79
    %v120 = vunpack.c.l.b16 %v80
    %v121 = vunpack.c.l.b16 %v81
    %v122 = vunpack.c.l.b16 %v82
    %v123 = vunpack.c.l.b16 %v83
    %v124 = vunpack.c.l.b16 %v84
    %v125 = vunpack.c.l.b16 %v85
    %v126 = vunpack.c.l.b16 %v86
    %v127 = vunpack.c.l.b16 %v87
    %v128 = vunpack.c.l.b16 %v88
    %v129 = vunpack.c.l.b16 %v89
    %v130 = vunpack.c.l.b16 %v90
    %v131 = vunpack.c.l.b16 %v91
    %v132 = vunpack.c.l.b16 %v92
    %v133 = vpack.c.b16 %v118, %v117
    %v134 = vpack.c.b16 %v120, %v119
    %v135 = vpack.c.b16 %v122, %v121
    %v136 = vpack.c.b16 %v124, %v123
    %v137 = vpack.c.b16 %v126, %v125
    %v138 = vpack.c.b16 %v128, %v127
    %v139 = vpack.c.b16 %v130, %v129
    %v140 = vpack.c.b16 %v132, %v131
    %149 = vmatprep.subr.bf16.mxu0 0
    %150 = vmatpush1.bf16.msra.mxu0 %v140
    %151 = vmatprep.subr.bf16.mxu0 0
    %152 = vmatpush1.bf16.msra.mxu0 %v139
    %153 = vmatprep.subr.bf16.mxu0 0
    %154 = vmatpush1.bf16.msra.mxu0 %v138
    %155 = vmatprep.subr.bf16.mxu0 0
    %156 = vmatpush1.bf16.msra.mxu0 %v137
    %157 = vmatprep.subr.bf16.mxu0 0
    %158 = vmatpush1.bf16.msra.mxu0 %v136
    %159 = vmatprep.subr.bf16.mxu0 0
    %160 = vmatpush1.bf16.msra.mxu0 %v135
    %161 = vmatprep.subr.bf16.mxu0 0
    %162 = vmatpush1.bf16.msra.mxu0 %v134
    %163 = vmatprep.subr.bf16.mxu0 0
    %164 = vmatpush1.bf16.msra.mxu0 %v133
    %165 = vmatprep.subr.bf16.mxu0 0
    %166 = vmatpush2.bf16.msra.mxu0 0
    %167 = vmatprep.subr.bf16.mxu0 0
    %168 = vmatpush2.bf16.msra.mxu0 0
    %169 = vmatprep.subr.bf16.mxu0 0
    %170 = vmatpush2.bf16.msra.mxu0 0
    %171 = vmatprep.subr.bf16.mxu0 0
    %172 = vmatpush2.bf16.msra.mxu0 0
    %173 = vmatprep.subr.bf16.mxu0 0
    %174 = vmatpush2.bf16.msra.mxu0 0
    %175 = vmatprep.subr.bf16.mxu0 0
    %176 = vmatpush2.bf16.msra.mxu0 0
    %177 = vmatprep.subr.bf16.mxu0 0
    %178 = vmatpush2.bf16.msra.mxu0 0
    %179 = vmatprep.subr.bf16.mxu0 0
    %180 = vmatpush2.bf16.msra.mxu0 0
    %181 = vmatprep.mubr.bf16.mxu0 0
    %182 = vmatmul.mubr.bf16.gmra.mxu0 %v100
    %v183 = vpop.f32.mrf.mxu0
    %v184 = vadd.f32 0.0, %v183
    %v185 = vpop.f32.mrf.mxu0
    %v186 = vpop.f32.mrf.mxu0
    %v187 = vadd.f32 0.0, %v186
    %v188 = vpop.f32.mrf.mxu0
    %189 = vdwg.mxu0
    %v190 = vadd.f32 %v98, %v184
    %v191 = vadd.f32 %v99, %v187
    %v192 = vtanh.pop %v190
    %v193 = vtanh.pop %v191
    %s194 = scalar_lea.vmem [#allocation2], 32
    %v195 = vld [vmem:[%s194] sm:$0xff]
    %v196 = vld [vmem:[%s194 + $0x8] sm:$0xff]
    %v197 = vpack.c.bf16 %v193, %v192
    %198 = vmatprep.subr.bf16.mxu0 0
    %199 = vmatpush1.bf16.msra.mxu0 %v140
    %200 = vmatprep.subr.bf16.mxu0 0
    %201 = vmatpush1.bf16.msra.mxu0 %v139
    %202 = vmatprep.subr.bf16.mxu0 0
    %203 = vmatpush1.bf16.msra.mxu0 %v138
    %204 = vmatprep.subr.bf16.mxu0 0
    %205 = vmatpush1.bf16.msra.mxu0 %v137
    %206 = vmatprep.subr.bf16.mxu0 0
    %207 = vmatpush1.bf16.msra.mxu0 %v136
    %208 = vmatprep.subr.bf16.mxu0 0
    %209 = vmatpush1.bf16.msra.mxu0 %v135
    %210 = vmatprep.subr.bf16.mxu0 0
    %211 = vmatpush1.bf16.msra.mxu0 %v134
    %212 = vmatprep.subr.bf16.mxu0 0
    %213 = vmatpush1.bf16.msra.mxu0 %v133
    %214 = vmatprep.subr.bf16.mxu0 0
    %215 = vmatpush2.bf16.msra.mxu0 0
    %216 = vmatprep.subr.bf16.mxu0 0
    %217 = vmatpush2.bf16.msra.mxu0 0
    %218 = vmatprep.subr.bf16.mxu0 0
    %219 = vmatpush2.bf16.msra.mxu0 0
    %220 = vmatprep.subr.bf16.mxu0 0
    %221 = vmatpush2.bf16.msra.mxu0 0
    %222 = vmatprep.subr.bf16.mxu0 0
    %223 = vmatpush2.bf16.msra.mxu0 0
    %224 = vmatprep.subr.bf16.mxu0 0
    %225 = vmatpush2.bf16.msra.mxu0 0
    %226 = vmatprep.subr.bf16.mxu0 0
    %227 = vmatpush2.bf16.msra.mxu0 0
    %228 = vmatprep.subr.bf16.mxu0 0
    %229 = vmatpush2.bf16.msra.mxu0 0
    %230 = vmatprep.mubr.bf16.mxu0 0
    %231 = vmatmul.mubr.bf16.gmra.mxu0 %v197
    %v232 = vpop.f32.mrf.mxu0
    %v233 = vadd.f32 0.0, %v232
    %v234 = vpop.f32.mrf.mxu0
    %v235 = vpop.f32.mrf.mxu0
    %v236 = vadd.f32 0.0, %v235
    %v237 = vpop.f32.mrf.mxu0
    %238 = vdwg.mxu0
    %v239 = vadd.f32 %v195, %v233
    %v240 = vadd.f32 %v196, %v236
    %v241 = vtanh.pop %v239
    %v242 = vtanh.pop %v240
    %s243 = scalar_lea.vmem [#allocation2], 48
    %v244 = vld [vmem:[%s243] sm:$0xff]
    %v245 = vld [vmem:[%s243 + $0x8] sm:$0xff]
    %v246 = vpack.c.bf16 %v242, %v241
    %247 = vmatprep.subr.bf16.mxu0 0
    %248 = vmatpush1.bf16.msra.mxu0 %v140
    %249 = vmatprep.subr.bf16.mxu0 0
    %250 = vmatpush1.bf16.msra.mxu0 %v139
    %251 = vmatprep.subr.bf16.mxu0 0
    %252 = vmatpush1.bf16.msra.mxu0 %v138
    %253 = vmatprep.subr.bf16.mxu0 0
    %254 = vmatpush1.bf16.msra.mxu0 %v137
    %255 = vmatprep.subr.bf16.mxu0 0
    %256 = vmatpush1.bf16.msra.mxu0 %v136
    %257 = vmatprep.subr.bf16.mxu0 0
    %258 = vmatpush1.bf16.msra.mxu0 %v135
    %259 = vmatprep.subr.bf16.mxu0 0
    %260 = vmatpush1.bf16.msra.mxu0 %v134
    %261 = vmatprep.subr.bf16.mxu0 0
    %262 = vmatpush1.bf16.msra.mxu0 %v133
    %263 = vmatprep.subr.bf16.mxu0 0
    %264 = vmatpush2.bf16.msra.mxu0 0
    %265 = vmatprep.subr.bf16.mxu0 0
    %266 = vmatpush2.bf16.msra.mxu0 0
    %267 = vmatprep.subr.bf16.mxu0 0
    %268 = vmatpush2.bf16.msra.mxu0 0
    %269 = vmatprep.subr.bf16.mxu0 0
    %270 = vmatpush2.bf16.msra.mxu0 0
    %271 = vmatprep.subr.bf16.mxu0 0
    %272 = vmatpush2.bf16.msra.mxu0 0
    %273 = vmatprep.subr.bf16.mxu0 0
    %274 = vmatpush2.bf16.msra.mxu0 0
    %275 = vmatprep.subr.bf16.mxu0 0
    %276 = vmatpush2.bf16.msra.mxu0 0
    %277 = vmatprep.subr.bf16.mxu0 0
    %278 = vmatpush2.bf16.msra.mxu0 0
    %279 = vmatprep.mubr.bf16.mxu0 0
    %280 = vmatmul.mubr.bf16.gmra.mxu0 %v246
    %v281 = vpop.f32.mrf.mxu0
    %v282 = vadd.f32 0.0, %v281
    %v283 = vpop.f32.mrf.mxu0
    %v284 = vpop.f32.mrf.mxu0
    %v285 = vadd.f32 0.0, %v284
    %v286 = vpop.f32.mrf.mxu0
    %287 = vdwg.mxu0
    %v288 = vadd.f32 %v244, %v282
    %v289 = vadd.f32 %v245, %v285
    %v290 = vtanh.pop %v288
    %v291 = vtanh.pop %v289
    %s292 = scalar_lea.vmem [#allocation2], 64
    %v293 = vld [vmem:[%s292] sm:$0xff]
    %v294 = vld [vmem:[%s292 + $0x8] sm:$0xff]
    %v295 = vpack.c.bf16 %v291, %v290
    %296 = vmatprep.subr.bf16.mxu0 0
    %297 = vmatpush1.bf16.msra.mxu0 %v140
    %298 = vmatprep.subr.bf16.mxu0 0
    %299 = vmatpush1.bf16.msra.mxu0 %v139
    %300 = vmatprep.subr.bf16.mxu0 0
    %301 = vmatpush1.bf16.msra.mxu0 %v138
    %302 = vmatprep.subr.bf16.mxu0 0
    %303 = vmatpush1.bf16.msra.mxu0 %v137
    %304 = vmatprep.subr.bf16.mxu0 0
    %305 = vmatpush1.bf16.msra.mxu0 %v136
    %306 = vmatprep.subr.bf16.mxu0 0
    %307 = vmatpush1.bf16.msra.mxu0 %v135
    %308 = vmatprep.subr.bf16.mxu0 0
    %309 = vmatpush1.bf16.msra.mxu0 %v134
    %310 = vmatprep.subr.bf16.mxu0 0
    %311 = vmatpush1.bf16.msra.mxu0 %v133
    %312 = vmatprep.subr.bf16.mxu0 0
    %313 = vmatpush2.bf16.msra.mxu0 0
    %314 = vmatprep.subr.bf16.mxu0 0
    %315 = vmatpush2.bf16.msra.mxu0 0
    %316 = vmatprep.subr.bf16.mxu0 0
    %317 = vmatpush2.bf16.msra.mxu0 0
    %318 = vmatprep.subr.bf16.mxu0 0
    %319 = vmatpush2.bf16.msra.mxu0 0
    %320 = vmatprep.subr.bf16.mxu0 0
    %321 = vmatpush2.bf16.msra.mxu0 0
    %322 = vmatprep.subr.bf16.mxu0 0
    %323 = vmatpush2.bf16.msra.mxu0 0
    %324 = vmatprep.subr.bf16.mxu0 0
    %325 = vmatpush2.bf16.msra.mxu0 0
    %326 = vmatprep.subr.bf16.mxu0 0
    %327 = vmatpush2.bf16.msra.mxu0 0
    %328 = vmatprep.mubr.bf16.mxu0 0
    %329 = vmatmul.mubr.bf16.gmra.mxu0 %v295
    %v330 = vpop.f32.mrf.mxu0
    %v331 = vadd.f32 0.0, %v330
    %v332 = vpop.f32.mrf.mxu0
    %v333 = vpop.f32.mrf.mxu0
    %v334 = vadd.f32 0.0, %v333
    %v335 = vpop.f32.mrf.mxu0
    %336 = vdwg.mxu0
    %v337 = vadd.f32 %v293, %v331
    %v338 = vadd.f32 %v294, %v334
    %v339 = vtanh.pop %v337
    %v340 = vtanh.pop %v338
    %s341 = scalar_lea.vmem [#allocation2], 80
    %v342 = vld [vmem:[%s341] sm:$0xff]
    %v343 = vld [vmem:[%s341 + $0x8] sm:$0xff]
    %v344 = vpack.c.bf16 %v340, %v339
    %345 = vmatprep.subr.bf16.mxu0 0
    %346 = vmatpush1.bf16.msra.mxu0 %v140
    %347 = vmatprep.subr.bf16.mxu0 0
    %348 = vmatpush1.bf16.msra.mxu0 %v139
    %349 = vmatprep.subr.bf16.mxu0 0
    %350 = vmatpush1.bf16.msra.mxu0 %v138
    %351 = vmatprep.subr.bf16.mxu0 0
    %352 = vmatpush1.bf16.msra.mxu0 %v137
    %353 = vmatprep.subr.bf16.mxu0 0
    %354 = vmatpush1.bf16.msra.mxu0 %v136
    %355 = vmatprep.subr.bf16.mxu0 0
    %356 = vmatpush1.bf16.msra.mxu0 %v135
    %357 = vmatprep.subr.bf16.mxu0 0
    %358 = vmatpush1.bf16.msra.mxu0 %v134
    %359 = vmatprep.subr.bf16.mxu0 0
    %360 = vmatpush1.bf16.msra.mxu0 %v133
    %361 = vmatprep.subr.bf16.mxu0 0
    %362 = vmatpush2.bf16.msra.mxu0 0
    %363 = vmatprep.subr.bf16.mxu0 0
    %364 = vmatpush2.bf16.msra.mxu0 0
    %365 = vmatprep.subr.bf16.mxu0 0
    %366 = vmatpush2.bf16.msra.mxu0 0
    %367 = vmatprep.subr.bf16.mxu0 0
    %368 = vmatpush2.bf16.msra.mxu0 0
    %369 = vmatprep.subr.bf16.mxu0 0
    %370 = vmatpush2.bf16.msra.mxu0 0
    %371 = vmatprep.subr.bf16.mxu0 0
    %372 = vmatpush2.bf16.msra.mxu0 0
    %373 = vmatprep.subr.bf16.mxu0 0
    %374 = vmatpush2.bf16.msra.mxu0 0
    %375 = vmatprep.subr.bf16.mxu0 0
    %376 = vmatpush2.bf16.msra.mxu0 0
    %377 = vmatprep.mubr.bf16.mxu0 0
    %378 = vmatmul.mubr.bf16.gmra.mxu0 %v344
    %v379 = vpop.f32.mrf.mxu0
    %v380 = vadd.f32 0.0, %v379
    %v381 = vpop.f32.mrf.mxu0
    %v382 = vpop.f32.mrf.mxu0
    %v383 = vadd.f32 0.0, %v382
    %v384 = vpop.f32.mrf.mxu0
    %385 = vdwg.mxu0
    %v386 = vadd.f32 %v342, %v380
    %v387 = vadd.f32 %v343, %v383
    %v388 = vtanh.pop %v386
    %v389 = vtanh.pop %v387
    %s390 = scalar_lea.vmem [#allocation2], 96
    %v391 = vld [vmem:[%s390] sm:$0xff]
    %v392 = vld [vmem:[%s390 + $0x8] sm:$0xff]
    %v393 = vpack.c.bf16 %v389, %v388
    %394 = vmatprep.subr.bf16.mxu0 0
    %395 = vmatpush1.bf16.msra.mxu0 %v140
    %396 = vmatprep.subr.bf16.mxu0 0
    %397 = vmatpush1.bf16.msra.mxu0 %v139
    %398 = vmatprep.subr.bf16.mxu0 0
    %399 = vmatpush1.bf16.msra.mxu0 %v138
    %400 = vmatprep.subr.bf16.mxu0 0
    %401 = vmatpush1.bf16.msra.mxu0 %v137
    %402 = vmatprep.subr.bf16.mxu0 0
    %403 = vmatpush1.bf16.msra.mxu0 %v136
    %404 = vmatprep.subr.bf16.mxu0 0
    %405 = vmatpush1.bf16.msra.mxu0 %v135
    %406 = vmatprep.subr.bf16.mxu0 0
    %407 = vmatpush1.bf16.msra.mxu0 %v134
    %408 = vmatprep.subr.bf16.mxu0 0
    %409 = vmatpush1.bf16.msra.mxu0 %v133
    %410 = vmatprep.subr.bf16.mxu0 0
    %411 = vmatpush2.bf16.msra.mxu0 0
    %412 = vmatprep.subr.bf16.mxu0 0
    %413 = vmatpush2.bf16.msra.mxu0 0
    %414 = vmatprep.subr.bf16.mxu0 0
    %415 = vmatpush2.bf16.msra.mxu0 0
    %416 = vmatprep.subr.bf16.mxu0 0
    %417 = vmatpush2.bf16.msra.mxu0 0
    %418 = vmatprep.subr.bf16.mxu0 0
    %419 = vmatpush2.bf16.msra.mxu0 0
    %420 = vmatprep.subr.bf16.mxu0 0
    %421 = vmatpush2.bf16.msra.mxu0 0
    %422 = vmatprep.subr.bf16.mxu0 0
    %423 = vmatpush2.bf16.msra.mxu0 0
    %424 = vmatprep.subr.bf16.mxu0 0
    %425 = vmatpush2.bf16.msra.mxu0 0
    %426 = vmatprep.mubr.bf16.mxu0 0
    %427 = vmatmul.mubr.bf16.gmra.mxu0 %v393
    %v428 = vpop.f32.mrf.mxu0
    %v429 = vadd.f32 0.0, %v428
    %v430 = vpop.f32.mrf.mxu0
    %v431 = vpop.f32.mrf.mxu0
    %v432 = vadd.f32 0.0, %v431
    %v433 = vpop.f32.mrf.mxu0
    %434 = vdwg.mxu0
    %v435 = vadd.f32 %v391, %v429
    %v436 = vadd.f32 %v392, %v432
    %v437 = vtanh.pop %v435
    %v438 = vtanh.pop %v436
    %s439 = scalar_lea.vmem [#allocation2], 112
    %v440 = vld [vmem:[%s439] sm:$0xff]
    %v441 = vld [vmem:[%s439 + $0x8] sm:$0xff]
    %v442 = vpack.c.bf16 %v438, %v437
    %443 = vmatprep.subr.bf16.mxu0 0
    %444 = vmatpush1.bf16.msra.mxu0 %v140
    %445 = vmatprep.subr.bf16.mxu0 0
    %446 = vmatpush1.bf16.msra.mxu0 %v139
    %447 = vmatprep.subr.bf16.mxu0 0
    %448 = vmatpush1.bf16.msra.mxu0 %v138
    %449 = vmatprep.subr.bf16.mxu0 0
    %450 = vmatpush1.bf16.msra.mxu0 %v137
    %451 = vmatprep.subr.bf16.mxu0 0
    %452 = vmatpush1.bf16.msra.mxu0 %v136
    %453 = vmatprep.subr.bf16.mxu0 0
    %454 = vmatpush1.bf16.msra.mxu0 %v135
    %455 = vmatprep.subr.bf16.mxu0 0
    %456 = vmatpush1.bf16.msra.mxu0 %v134
    %457 = vmatprep.subr.bf16.mxu0 0
    %458 = vmatpush1.bf16.msra.mxu0 %v133
    %459 = vmatprep.subr.bf16.mxu0 0
    %460 = vmatpush2.bf16.msra.mxu0 0
    %461 = vmatprep.subr.bf16.mxu0 0
    %462 = vmatpush2.bf16.msra.mxu0 0
    %463 = vmatprep.subr.bf16.mxu0 0
    %464 = vmatpush2.bf16.msra.mxu0 0
    %465 = vmatprep.subr.bf16.mxu0 0
    %466 = vmatpush2.bf16.msra.mxu0 0
    %467 = vmatprep.subr.bf16.mxu0 0
    %468 = vmatpush2.bf16.msra.mxu0 0
    %469 = vmatprep.subr.bf16.mxu0 0
    %470 = vmatpush2.bf16.msra.mxu0 0
    %471 = vmatprep.subr.bf16.mxu0 0
    %472 = vmatpush2.bf16.msra.mxu0 0
    %473 = vmatprep.subr.bf16.mxu0 0
    %474 = vmatpush2.bf16.msra.mxu0 0
    %475 = vmatprep.mubr.bf16.mxu0 0
    %476 = vmatmul.mubr.bf16.gmra.mxu0 %v442
    %v477 = vpop.f32.mrf.mxu0
    %v478 = vadd.f32 0.0, %v477
    %v479 = vpop.f32.mrf.mxu0
    %v480 = vpop.f32.mrf.mxu0
    %v481 = vadd.f32 0.0, %v480
    %v482 = vpop.f32.mrf.mxu0
    %483 = vdwg.mxu0
    %v484 = vadd.f32 %v440, %v478
    %v485 = vadd.f32 %v441, %v481
    %v486 = vtanh.pop %v484
    %v487 = vtanh.pop %v485
    %v488 = vpack.c.bf16 %v487, %v486
    %v489 = vld [vmem:[#allocation7] sm:$0xf]
    %v490 = vld [vmem:[#allocation7 + $0x4] sm:$0xf]
    %v491 = vld [vmem:[#allocation7 + $0x8] sm:$0xf]
    %v492 = vld [vmem:[#allocation7 + $0xc] sm:$0xf]
    %v493 = vld [vmem:[#allocation7 + $0x10] sm:$0xf]
    %v494 = vld [vmem:[#allocation7 + $0x14] sm:$0xf]
    %v495 = vld [vmem:[#allocation7 + $0x18] sm:$0xf]
    %v496 = vld [vmem:[#allocation7 + $0x1c] sm:$0xf]
    %v497 = vld [vmem:[#allocation7 + $0x20] sm:$0xf]
    %v498 = vld [vmem:[#allocation7 + $0x24] sm:$0xf]
    %v499 = vld [vmem:[#allocation7 + $0x28] sm:$0xf]
    %v500 = vld [vmem:[#allocation7 + $0x2c] sm:$0xf]
    %v501 = vld [vmem:[#allocation7 + $0x30] sm:$0xf]
    %v502 = vld [vmem:[#allocation7 + $0x34] sm:$0xf]
    %v503 = vld [vmem:[#allocation7 + $0x38] sm:$0xf]
    %v504 = vld [vmem:[#allocation7 + $0x3c] sm:$0xf]
    %v505 = vld [vmem:[#allocation8] sm:$0xf]
    %v506 = vld [vmem:[#allocation8 + $0x4] sm:$0xf]
    %v507 = vld [vmem:[#allocation8 + $0x8] sm:$0xf]
    %v508 = vld [vmem:[#allocation8 + $0xc] sm:$0xf]
    %v509 = vld [vmem:[#allocation8 + $0x10] sm:$0xf]
    %v510 = vld [vmem:[#allocation8 + $0x14] sm:$0xf]
    %v511 = vld [vmem:[#allocation8 + $0x18] sm:$0xf]
    %v512 = vld [vmem:[#allocation8 + $0x1c] sm:$0xf]
    %v513 = vld [vmem:[#allocation8 + $0x20] sm:$0xf]
    %v514 = vld [vmem:[#allocation8 + $0x24] sm:$0xf]
    %v515 = vld [vmem:[#allocation8 + $0x28] sm:$0xf]
    %v516 = vld [vmem:[#allocation8 + $0x2c] sm:$0xf]
    %v517 = vld [vmem:[#allocation8 + $0x30] sm:$0xf]
    %v518 = vld [vmem:[#allocation8 + $0x34] sm:$0xf]
    %v519 = vld [vmem:[#allocation8 + $0x38] sm:$0xf]
    %v520 = vld [vmem:[#allocation8 + $0x3c] sm:$0xf]
    %v522 = vrot.slane %v488, 4
    %v540 = vunpack.c.l.b16 %v505
    %v541 = vunpack.c.l.b16 %v506
    %v542 = vunpack.c.l.b16 %v507
    %v543 = vunpack.c.l.b16 %v508
    %v544 = vunpack.c.l.b16 %v509
    %v545 = vunpack.c.l.b16 %v510
    %v546 = vunpack.c.l.b16 %v511
    %v547 = vunpack.c.l.b16 %v512
    %v548 = vunpack.c.l.b16 %v513
    %v549 = vunpack.c.l.b16 %v514
    %v550 = vunpack.c.l.b16 %v515
    %v551 = vunpack.c.l.b16 %v516
    %v552 = vunpack.c.l.b16 %v517
    %v553 = vunpack.c.l.b16 %v518
    %v554 = vunpack.c.l.b16 %v519
    %v555 = vunpack.c.l.b16 %v520
    %v556 = vpack.c.b16 %v541, %v540
    %v557 = vpack.c.b16 %v543, %v542
    %v558 = vpack.c.b16 %v545, %v544
    %v559 = vpack.c.b16 %v547, %v546
    %v560 = vpack.c.b16 %v549, %v548
    %v561 = vpack.c.b16 %v551, %v550
    %v562 = vpack.c.b16 %v553, %v552
    %v563 = vpack.c.b16 %v555, %v554
    %572 = vmatprep.subr.bf16.mxu0 0
    %573 = vmatpush1.bf16.msra.mxu0 %v563
    %574 = vmatprep.subr.bf16.mxu0 0
    %575 = vmatpush1.bf16.msra.mxu0 %v562
    %576 = vmatprep.subr.bf16.mxu0 0
    %577 = vmatpush1.bf16.msra.mxu0 %v561
    %578 = vmatprep.subr.bf16.mxu0 0
    %579 = vmatpush1.bf16.msra.mxu0 %v560
    %580 = vmatprep.subr.bf16.mxu0 0
    %581 = vmatpush1.bf16.msra.mxu0 %v559
    %582 = vmatprep.subr.bf16.mxu0 0
    %583 = vmatpush1.bf16.msra.mxu0 %v558
    %584 = vmatprep.subr.bf16.mxu0 0
    %585 = vmatpush1.bf16.msra.mxu0 %v557
    %586 = vmatprep.subr.bf16.mxu0 0
    %587 = vmatpush1.bf16.msra.mxu0 %v556
    %588 = vmatprep.subr.bf16.mxu0 0
    %589 = vmatpush2.bf16.msra.mxu0 0
    %590 = vmatprep.subr.bf16.mxu0 0
    %591 = vmatpush2.bf16.msra.mxu0 0
    %592 = vmatprep.subr.bf16.mxu0 0
    %593 = vmatpush2.bf16.msra.mxu0 0
    %594 = vmatprep.subr.bf16.mxu0 0
    %595 = vmatpush2.bf16.msra.mxu0 0
    %596 = vmatprep.subr.bf16.mxu0 0
    %597 = vmatpush2.bf16.msra.mxu0 0
    %598 = vmatprep.subr.bf16.mxu0 0
    %599 = vmatpush2.bf16.msra.mxu0 0
    %600 = vmatprep.subr.bf16.mxu0 0
    %601 = vmatpush2.bf16.msra.mxu0 0
    %602 = vmatprep.subr.bf16.mxu0 0
    %603 = vmatpush2.bf16.msra.mxu0 0
    %604 = vmatprep.mubr.bf16.mxu0 0
    %605 = vmatmul.mubr.bf16.gmra.mxu0 %v522
    %v606 = vpop.f32.mrf.mxu0
    %v607 = vadd.f32 0.0, %v606
    %v608 = vpop.f32.mrf.mxu0
    %v609 = vpop.f32.mrf.mxu0
    %v610 = vpop.f32.mrf.mxu0
    %611 = vdwg.mxu0
    %v628 = vunpack.c.l.b16 %v489
    %v629 = vunpack.c.l.b16 %v490
    %v630 = vunpack.c.l.b16 %v491
    %v631 = vunpack.c.l.b16 %v492
    %v632 = vunpack.c.l.b16 %v493
    %v633 = vunpack.c.l.b16 %v494
    %v634 = vunpack.c.l.b16 %v495
    %v635 = vunpack.c.l.b16 %v496
    %v636 = vunpack.c.l.b16 %v497
    %v637 = vunpack.c.l.b16 %v498
    %v638 = vunpack.c.l.b16 %v499
    %v639 = vunpack.c.l.b16 %v500
    %v640 = vunpack.c.l.b16 %v501
    %v641 = vunpack.c.l.b16 %v502
    %v642 = vunpack.c.l.b16 %v503
    %v643 = vunpack.c.l.b16 %v504
    %v644 = vpack.c.b16 %v629, %v628
    %v645 = vpack.c.b16 %v631, %v630
    %v646 = vpack.c.b16 %v633, %v632
    %v647 = vpack.c.b16 %v635, %v634
    %v648 = vpack.c.b16 %v637, %v636
    %v649 = vpack.c.b16 %v639, %v638
    %v650 = vpack.c.b16 %v641, %v640
    %v651 = vpack.c.b16 %v643, %v642
    %660 = vmatprep.subr.bf16.mxu0 0
    %661 = vmatpush1.bf16.msra.mxu0 %v651
    %662 = vmatprep.subr.bf16.mxu0 0
    %663 = vmatpush1.bf16.msra.mxu0 %v650
    %664 = vmatprep.subr.bf16.mxu0 0
    %665 = vmatpush1.bf16.msra.mxu0 %v649
    %666 = vmatprep.subr.bf16.mxu0 0
    %667 = vmatpush1.bf16.msra.mxu0 %v648
    %668 = vmatprep.subr.bf16.mxu0 0
    %669 = vmatpush1.bf16.msra.mxu0 %v647
    %670 = vmatprep.subr.bf16.mxu0 0
    %671 = vmatpush1.bf16.msra.mxu0 %v646
    %672 = vmatprep.subr.bf16.mxu0 0
    %673 = vmatpush1.bf16.msra.mxu0 %v645
    %674 = vmatprep.subr.bf16.mxu0 0
    %675 = vmatpush1.bf16.msra.mxu0 %v644
    %676 = vmatprep.subr.bf16.mxu0 0
    %677 = vmatpush2.bf16.msra.mxu0 0
    %678 = vmatprep.subr.bf16.mxu0 0
    %679 = vmatpush2.bf16.msra.mxu0 0
    %680 = vmatprep.subr.bf16.mxu0 0
    %681 = vmatpush2.bf16.msra.mxu0 0
    %682 = vmatprep.subr.bf16.mxu0 0
    %683 = vmatpush2.bf16.msra.mxu0 0
    %684 = vmatprep.subr.bf16.mxu0 0
    %685 = vmatpush2.bf16.msra.mxu0 0
    %686 = vmatprep.subr.bf16.mxu0 0
    %687 = vmatpush2.bf16.msra.mxu0 0
    %688 = vmatprep.subr.bf16.mxu0 0
    %689 = vmatpush2.bf16.msra.mxu0 0
    %690 = vmatprep.subr.bf16.mxu0 0
    %691 = vmatpush2.bf16.msra.mxu0 0
    %692 = vmatprep.mubr.bf16.mxu0 0
    %693 = vmatmul.mubr.bf16.gmra.mxu0 %v488
    %v694 = vpop.f32.mrf.mxu0
    %v695 = vadd.f32 %v607, %v694
    %v696 = vpop.f32.mrf.mxu0
    %v697 = vpop.f32.mrf.mxu0
    %v698 = vpop.f32.mrf.mxu0
    %699 = vdwg.mxu0
    %v700 = vld [vmem:[%s4] sm:$0x1]
    %v702 = vlaneseq
    %v703 = vshrl.u32 %v702, 7
    %v704 = vsub.s32 0, %v703
    %v705 = vrot.slane %v700, %v704
    %v707 = vadd.f32 %v695, %v705
    %708 = vst [vmem:[#allocation10] sm:$0xff] %v707
    // Predicated region
    $region38: #{tpu_custom_call.1} parent=1 // pred_check
      _
    $region39: #{tpu_custom_call.1} parent=1 // pred_check_branch
      %710 = sbr.rel (0) target = $region41
    $region40: #{tpu_custom_call.1} parent=1 // pred_region
      %s712 = ssub.s32 128, 128
      %713 = vsyncadd [#allocation4], %s712
      %s715 = sshll.u32 [#allocation10], 4
      %s716 = int_to_ptr.vmem [resolvable:$true] %s715
      %718 = dma.vmem_to_hbm [thread:$0]  %s716, 128, %s5, [#allocation4]
    $region41: #{tpu_custom_call.1} parent=1 // pred_fallthru
      _
    // Predicated region
    $region42: #{tpu_custom_call.1} parent=1 // pred_check
      _
    $region43: #{tpu_custom_call.1} parent=1 // pred_check_branch
      %720 = sbr.rel (0) target = $region45
    $region44: #{tpu_custom_call.1} parent=1 // pred_region
      %721 = dma.done [#allocation4], 128
    $region45: #{tpu_custom_call.1} parent=1 // pred_fallthru
      _
    %722 = vsyncpa [#allocation3], 1
    %723 = vsyncpa [#allocation6], 1
    %724 = vsyncpa [#allocation9], 1
    %725 = vsyncpa [#allocation4], 1

</llo_original>
